<compile_context>
chip_gen: v5e
topology: v5e:2x2
jax: 0.10.0
libtpu: 0.0.40
codegen_flags: <defaults>
</compile_context>

<pallas_src>
import jax
import jax.numpy as jnp
from jax.experimental import pallas as pl
from jax.experimental.pallas import tpu as pltpu


def _round_up(x: int, m: int) -> int:
    return (x + m - 1) // m * m


def _sine_layer_kernel(x_ref, w_ref, b_ref, o_ref):
    # x_ref: (tile_m, d_in_p)   bf16 (or f32)
    # w_ref: (d_in_p, tile_n)   bf16 (or f32)   -- omega_0 already folded in
    # b_ref: (1, tile_n)        f32             -- omega_0 already folded in
    # o_ref: (tile_m, tile_n)   f32
    z = jnp.dot(x_ref[...], w_ref[...], preferred_element_type=jnp.float32)
    o_ref[...] = jnp.sin(z + b_ref[...])


def sine_layer(x, w, b, omega_0=30.0, *, tile_m=None, tile_n=None,
               input_dtype=jnp.bfloat16):
    """Pallas SineLayer forward: sin(omega_0 * (x @ w.T + b)).

    Args:
      x: (n_samples, in_features) float32
      w: (out_features, in_features) float32  (nn.Linear layout)
      b: (out_features,) float32
      omega_0: scalar scale (folded into w/b before the kernel).
      tile_m: optional row tile (multiple of 16); auto-chosen if None.
      tile_n: optional output-column tile (multiple of 128); auto-chosen if None.
      input_dtype: dtype fed to the MXU (bf16 by default; accumulation is f32).
    Returns:
      (n_samples, out_features) float32
    """
    x = jnp.asarray(x, jnp.float32)
    w = jnp.asarray(w, jnp.float32)
    b = jnp.asarray(b, jnp.float32)

    n, d_in = x.shape
    d_out, d_in_w = w.shape
    assert d_in_w == d_in, "weight/in_features mismatch"

    in_bytes = jnp.dtype(input_dtype).itemsize

    # ---- Fold omega_0 into weights/bias (removes a per-element VPU multiply). --
    w_t_scaled = w.T * omega_0                   # (d_in, d_out), f32
    b_scaled = (b * omega_0).reshape(1, d_out)   # (1, d_out), f32

    # ---- Pad feature dims for tiled layouts / lane-dense output stores. -------
    d_in_p = max(_round_up(d_in, 16), 16)      # contraction dim (W sublane axis)
    d_out_p = max(_round_up(d_out, 128), 128)  # output lane axis: multiple of 128

    # ---- VMEM budget: conservative 32 MiB -> safe on v5e/v6e and v7x (64 MiB). -
    budget = 32 * 1024 * 1024

    # Output-column tile: the (double-buffered) weight tile gets <= half the
    # budget; for SIREN-sized layers this means tile_n == d_out_p (one column
    # tile, weight fully resident in VMEM).
    if tile_n is None:
        max_tn = ((budget // 2) // (2 * d_in_p * in_bytes)) // 128 * 128
        tile_n = int(max(128, min(d_out_p, max_tn)))
    assert tile_n % 128 == 0 and tile_n > 0, "tile_n must be a positive multiple of 128"
    d_out_p = _round_up(d_out_p, tile_n)

    # Row tile: as large as the remaining budget allows (fewer grid steps,
    # fatter MXU calls), capped at 1024 and at the (padded) sample count.
    if tile_m is None:
        resident = 2 * d_in_p * tile_n * in_bytes + 2 * tile_n * 4   # W + bias (dbl-buf)
        per_row = 2 * d_in_p * in_bytes + 2 * tile_n * 4             # x + out (dbl-buf)
        max_rows = max(16, (budget - resident) // per_row)
        tile_m = int(min(1024, max_rows, _round_up(max(n, 1), 16)))
        tile_m = max(16, (tile_m // 16) * 16)
    assert tile_m % 16 == 0 and tile_m > 0, "tile_m must be a positive multiple of 16"

    n_p = _round_up(max(n, 1), tile_m)

    # ---- Zero-pad inputs (padding rows/cols produce sin(0)=0 / sliced off). ---
    x_p = jnp.zeros((n_p, d_in_p), dtype=input_dtype)
    x_p = x_p.at[:n, :d_in].set(x.astype(input_dtype))
    w_p = jnp.zeros((d_in_p, d_out_p), dtype=input_dtype)
    w_p = w_p.at[:d_in, :d_out].set(w_t_scaled.astype(input_dtype))
    b_p = jnp.zeros((1, d_out_p), dtype=jnp.float32)
    b_p = b_p.at[:, :d_out].set(b_scaled)

    n_rows = n_p // tile_m
    n_cols = d_out_p // tile_n
    grid = (n_rows, n_cols)   # rows outer -> x tile stays resident across columns

    cost = pl.CostEstimate(
        flops=2 * n_p * d_in_p * d_out_p,
        transcendentals=n_p * d_out_p,
        bytes_accessed=(n_p * d_in_p * in_bytes                 # x (read once per row tile)
                        + n_rows * d_in_p * d_out_p * in_bytes  # w (re-read per row tile if tiled)
                        + d_out_p * 4                           # bias
                        + n_p * d_out_p * 4),                   # output
    )

    out_p = pl.pallas_call(
        _sine_layer_kernel,
        out_shape=jax.ShapeDtypeStruct((n_p, d_out_p), jnp.float32),
        grid_spec=pltpu.PrefetchScalarGridSpec(
            num_scalar_prefetch=0,
            grid=grid,
            in_specs=[
                pl.BlockSpec((tile_m, d_in_p), lambda i, j: (i, 0)),   # x row tile
                pl.BlockSpec((d_in_p, tile_n), lambda i, j: (0, j)),   # weight column tile
                pl.BlockSpec((1, tile_n), lambda i, j: (0, j)),        # bias column tile
            ],
            out_specs=pl.BlockSpec((tile_m, tile_n), lambda i, j: (i, j)),
        ),
        compiler_params=pltpu.CompilerParams(
            dimension_semantics=("parallel", "parallel"),  # independent tiles -> megacore
            vmem_limit_bytes=64 * 1024 * 1024,
        ),
        cost_estimate=cost,
    )(x_p, w_p, b_p)

    return out_p[:n, :d_out]


def init_sine_layer_params(key, in_features, out_features,
                           omega_0=30.0, is_first=False):
    """Deterministic init matching SineLayer.init_weights semantics."""
    kw, kb = jax.random.split(key)
    if is_first:
        bound_w = 1.0 / in_features
    else:
        bound_w = float(jnp.sqrt(6.0 / in_features) / omega_0)
    # nn.Linear default bias init: uniform(-1/sqrt(in), 1/sqrt(in))
    bound_b = 1.0 / float(jnp.sqrt(jnp.asarray(in_features, jnp.float32)))
    w = jax.random.uniform(kw, (out_features, in_features),
                           minval=-bound_w, maxval=bound_w, dtype=jnp.float32)
    b = jax.random.uniform(kb, (out_features,),
                           minval=-bound_b, maxval=bound_b, dtype=jnp.float32)
    return w, b


if __name__ == "__main__":
    key = jax.random.PRNGKey(0)
    kx, kp, kx2, kp2 = jax.random.split(key, 4)

    # ---- Test 1: aligned shapes, first SIREN layer (tight + loose checks). ----
    n_samples, in_features, out_features = 64, 32, 32
    omega_0 = 30.0

    x = jax.random.normal(kx, (n_samples, in_features), dtype=jnp.float32)
    w, b = init_sine_layer_params(kp, in_features, out_features,
                                  omega_0=omega_0, is_first=True)

    out = sine_layer(x, w, b, omega_0=omega_0)
    out = jax.block_until_ready(out)
    assert out.shape == (n_samples, out_features)

    # Reference matching the kernel's numerics (bf16-quantized inputs,
    # omega_0 folded into W/b, f32 accumulate / bias / sin).
    x_q = x.astype(jnp.bfloat16).astype(jnp.float32)
    w_t_q = (w.T * omega_0).astype(jnp.bfloat16).astype(jnp.float32)
    ref = jnp.sin(jnp.matmul(x_q, w_t_q, precision=jax.lax.Precision.HIGHEST)
                  + b * omega_0)
    assert jnp.allclose(out, ref, atol=1e-4, rtol=1e-4), "mismatch vs bf16-consistent reference"

    # Loose sanity check against the exact f32 PyTorch semantics
    # (difference only from bf16 input quantization of the mem-bound path).
    ref_f32 = jnp.sin(omega_0 * (x @ w.T + b))
    assert jnp.max(jnp.abs(out - ref_f32)) < 0.1, "drifted too far from f32 reference"

    # ---- Test 2: ragged shapes (exercise row/col/contraction padding). --------
    n2, in2, out2 = 100, 17, 200
    x2 = jax.random.normal(kx2, (n2, in2), dtype=jnp.float32)
    w2, b2 = init_sine_layer_params(kp2, in2, out2, omega_0=omega_0, is_first=False)

    out_2 = sine_layer(x2, w2, b2, omega_0=omega_0)
    out_2 = jax.block_until_ready(out_2)
    assert out_2.shape == (n2, out2)

    x2_q = x2.astype(jnp.bfloat16).astype(jnp.float32)
    w2_t_q = (w2.T * omega_0).astype(jnp.bfloat16).astype(jnp.float32)
    ref2 = jnp.sin(jnp.matmul(x2_q, w2_t_q, precision=jax.lax.Precision.HIGHEST)
                   + b2 * omega_0)
    assert jnp.allclose(out_2, ref2, atol=1e-3, rtol=1e-3), "padded-shape mismatch vs reference"

    print("KERNEL_OK")
</pallas_src>

<mosaic_0001>
module attributes {stable_mosaic.version = 11 : i64} {
  func.func @_sine_layer_kernel(%arg0: i32, %arg1: i32, %arg2: memref<64x32xbf16, #tpu.memory_space<vmem>>, %arg3: memref<32x128xbf16, #tpu.memory_space<vmem>>, %arg4: memref<1x128xf32, #tpu.memory_space<vmem>>, %arg5: memref<64x128xf32, #tpu.memory_space<vmem>>) attributes {dimension_semantics = [#tpu.dimension_semantics<parallel>, #tpu.dimension_semantics<parallel>], iteration_bounds = array<i64: 1, 1>, scalar_prefetch = 0 : i64, scratch_operands = 0 : i64, tpu.core_type = #tpu.core_type<tc>, window_params = [{transform_indices = @transform_0, window_bounds = array<i64: 64, 32>}, {transform_indices = @transform_1, window_bounds = array<i64: 32, 128>}, {transform_indices = @transform_2, window_bounds = array<i64: 1, 128>}, {transform_indices = @transform_3, window_bounds = array<i64: 64, 128>}]} {
    %c0 = arith.constant 0 : index
    %c0_0 = arith.constant 0 : index
    %0 = vector.load %arg2[%c0, %c0_0] : memref<64x32xbf16, #tpu.memory_space<vmem>>, vector<64x32xbf16>
    %c0_1 = arith.constant 0 : index
    %c0_2 = arith.constant 0 : index
    %1 = vector.load %arg3[%c0_1, %c0_2] : memref<32x128xbf16, #tpu.memory_space<vmem>>, vector<32x128xbf16>
    %cst = arith.constant dense<0.000000e+00> : vector<64x128xf32>
    %2 = tpu.matmul %0, %1, %cst {dimension_numbers = #tpu.dot_dimension_numbers<[1], [0], [0], [1], [0, 0, 1, 1], [], []>} : vector<64x32xbf16>, vector<32x128xbf16>, vector<64x128xf32> -> vector<64x128xf32>
    %c0_3 = arith.constant 0 : index
    %c0_4 = arith.constant 0 : index
    %3 = vector.load %arg4[%c0_3, %c0_4] : memref<1x128xf32, #tpu.memory_space<vmem>>, vector<1x128xf32>
    %4 = vector.broadcast %3 : vector<1x128xf32> to vector<64x128xf32>
    %5 = arith.addf %2, %4 : vector<64x128xf32>
    %6 = math.sin %5 : vector<64x128xf32>
    %c0_5 = arith.constant 0 : index
    %c0_6 = arith.constant 0 : index
    %7 = vector.load %arg5[%c0_5, %c0_6] : memref<64x128xf32, #tpu.memory_space<vmem>>, vector<64x128xf32>
    tpu.vector_store %arg5[%c0_5, %c0_6], %6 {strides = array<i32>} : memref<64x128xf32, #tpu.memory_space<vmem>>, vector<64x128xf32>,
    return
  }
  func.func @transform_0(%arg0: i32, %arg1: i32) -> (i32, i32) {
    %c0_i32 = arith.constant 0 : i32
    %c0_i32_0 = arith.constant 0 : i32
    return %arg0, %c0_i32 : i32, i32
  }
  func.func @transform_1(%arg0: i32, %arg1: i32) -> (i32, i32) {
    %c0_i32 = arith.constant 0 : i32
    %c0_i32_0 = arith.constant 0 : i32
    return %c0_i32, %arg1 : i32, i32
  }
  func.func @transform_2(%arg0: i32, %arg1: i32) -> (i32, i32) {
    %c0_i32 = arith.constant 0 : i32
    %c0_i32_0 = arith.constant 0 : i32
    return %c0_i32, %arg1 : i32, i32
  }
  func.func @transform_3(%arg0: i32, %arg1: i32) -> (i32, i32) {
    %c0_i32 = arith.constant 0 : i32
    return %arg0, %arg1 : i32, i32
  }
}

</mosaic_0001>

<llo_original>
// kernel: tpu_custom_call.1
$region0: #{tpu_custom_call.1}
  #allocation0 [shape = 'u32[]', space=smem, size = 0x4, offset = 0x4, fixed_abs, tag = 'smem constant byte address 0x4 - core index']
  #allocation1 [shape = 'u32[72,128]{1,0:T(1,128)}', space=vmem, size = 0x9000, scoped, tag = 'internal scratch']
  %s0 = inlined_call_operand.vmem [shape: bf16[64,32], index: 0, kind: input, shape index: {}]
  %s1 = inlined_call_operand.vmem [shape: bf16[32,128], index: 1, kind: input, shape index: {}]
  %s2 = inlined_call_operand.vmem [shape: f32[1,128], index: 2, kind: input, shape index: {}]
  %s3 = inlined_call_operand.hbm [shape: f32[64,128], index: 3, kind: output, shape index: {}]
  %s4 = sld [smem:[#allocation0]]
  $region22: #{tpu_custom_call.1} parent=0
    _
  %s6 = ssub.s32 1, %s4
  %s7 = scalar_select 0, %s6, %s4
  $region1: #{tpu_custom_call.1} parent=0
    #allocation2 [shape = 'u8[32768]{0}', space=vmem, size = 0x8000, scoped, tag = 'output window, operand 0, single buffered']
    #allocation3 [shape = 's32[1]{0}', space=sflag, size = 0x4, scoped, tag = 'scoped memory for tpu_custom_call.1']
    %8 = vsyncpa [#allocation3], 0
    // Predicated region
    $region2: #{tpu_custom_call.1} parent=1 // pred_check
      _
    $region3: #{tpu_custom_call.1} parent=1 // pred_check_branch
      %10 = sbr.rel (0) target = $region5
    $region4: #{tpu_custom_call.1} parent=1 // pred_region
      _
    $region5: #{tpu_custom_call.1} parent=1 // pred_fallthru
      _
    // Predicated region
    $region6: #{tpu_custom_call.1} parent=1 // pred_check
      _
    $region7: #{tpu_custom_call.1} parent=1 // pred_check_branch
      %12 = sbr.rel (0) target = $region9
    $region8: #{tpu_custom_call.1} parent=1 // pred_region
      _
    $region9: #{tpu_custom_call.1} parent=1 // pred_fallthru
      _
    // Predicated region
    $region10: #{tpu_custom_call.1} parent=1 // pred_check
      _
    $region11: #{tpu_custom_call.1} parent=1 // pred_check_branch
      %14 = sbr.rel (0) target = $region13
    $region12: #{tpu_custom_call.1} parent=1 // pred_region
      _
    $region13: #{tpu_custom_call.1} parent=1 // pred_fallthru
      _
    %v16 = vld [vmem:[%s0] sm:$0xf]
    %v17 = vld [vmem:[%s0 + $0x4] sm:$0xf]
    %v18 = vld [vmem:[%s0 + $0x8] sm:$0xf]
    %v19 = vld [vmem:[%s0 + $0xc] sm:$0xf]
    %v20 = vld [vmem:[%s0 + $0x10] sm:$0xf]
    %v21 = vld [vmem:[%s0 + $0x14] sm:$0xf]
    %v22 = vld [vmem:[%s0 + $0x18] sm:$0xf]
    %v23 = vld [vmem:[%s0 + $0x1c] sm:$0xf]
    %v24 = vld [vmem:[%s1] sm:$0xf]
    %v25 = vld [vmem:[%s1 + $0x4] sm:$0xf]
    %v26 = vld [vmem:[%s1 + $0x8] sm:$0xf]
    %v27 = vld [vmem:[%s1 + $0xc] sm:$0xf]
    %v28 = vld [vmem:[%s2] sm:$0x1]
    %v30 = vperm.slane %v28, 0
    %v40 = vunpack.c.l.b16 %v16
    %v41 = vunpack.c.l.b16 %v17
    %v42 = vunpack.c.l.b16 %v18
    %v43 = vunpack.c.l.b16 %v19
    %v44 = vunpack.c.l.b16 %v20
    %v45 = vunpack.c.l.b16 %v21
    %v46 = vunpack.c.l.b16 %v22
    %v47 = vunpack.c.l.b16 %v23
    %v48 = vpack.c.b16 %v41, %v40
    %v49 = vpack.c.b16 %v43, %v42
    %v50 = vpack.c.b16 %v45, %v44
    %v51 = vpack.c.b16 %v47, %v46
    %v56 = vunpack.c.l.b16 %v24
    %v57 = vunpack.c.l.b16 %v25
    %v58 = vunpack.c.l.b16 %v26
    %v59 = vunpack.c.l.b16 %v27
    %v60 = vpack.c.b16 %v57, %v56
    %v61 = vpack.c.b16 %v59, %v58
    %vm64 = vcmask 261120
    %v66 = vsel %vm64, %v48, 0
    %v69 = vsel %vm64, %v49, 0
    %v72 = vsel %vm64, %v50, 0
    %v75 = vsel %vm64, %v51, 0
    %77 = vmatpush.bf16.msra.mxu0 0
    %78 = vmatpush.bf16.msra.mxu0 0
    %79 = vmatpush.bf16.msra.mxu0 0
    %80 = vmatpush.bf16.msra.mxu0 0
    %81 = vmatpush.bf16.msra.mxu0 0
    %82 = vmatpush.bf16.msra.mxu0 0
    %83 = vmatpush.bf16.msra.mxu0 %v61
    %84 = vmatpush.bf16.msra.mxu0 %v60
    %85 = vmatmul.bf16.gmra.mxu0 %v66
    %v86 = vpop.f32.mrf.mxu0
    %v87 = vadd.f32 %v30, %v86
    %v88 = vpop.f32.mrf.mxu0
    %v89 = vadd.f32 %v30, %v88
    %90 = vmatmul.bf16.gmra.mxu0 %v69
    %v91 = vpop.f32.mrf.mxu0
    %v92 = vadd.f32 %v30, %v91
    %v93 = vpop.f32.mrf.mxu0
    %v94 = vadd.f32 %v30, %v93
    %95 = vmatmul.bf16.gmra.mxu0 %v72
    %v96 = vpop.f32.mrf.mxu0
    %v97 = vadd.f32 %v30, %v96
    %v98 = vpop.f32.mrf.mxu0
    %v99 = vadd.f32 %v30, %v98
    %100 = vmatmul.bf16.gmra.mxu0 %v75
    %v101 = vpop.f32.mrf.mxu0
    %v102 = vadd.f32 %v30, %v101
    %v103 = vpop.f32.mrf.mxu0
    %v104 = vadd.f32 %v30, %v103
    %105 = vdwg.mxu0
    %v106 = vand.u32 2147483647, %v87
    %vm107 = vcmp.le.f32.partialorder %v106, 0.7853982
    %vm108 = vcmp.lt.s32.totalorder %v87, 0
    %v109 = vand.u32 %v87, 2139095040
    %v110 = vshrl.u32 %v109, 23
    %v111 = vsub.s32 %v110, 127
    %v112 = vand.u32 2147483647, %v87
    %v113 = vand.u32 %v112, 8388607
    %v114 = vor.u32 %v113, 8388608
    %v115 = vsub.s32 0, %v114
    %v116 = vadd.s32 %v111, 1
    %vm117 = vcmp.gt.s32.totalorder %v116, 0
    %v118 = vsel %vm117, %v116, 0
    %v119 = vshrl.u32 %v118, 5
    %v120 = vand.u32 %v118, 31
    %v121 = vsub.s32 32, %v120
    %v122 = vshrl.u32 683565275, %v121
    %v123 = vshll.u32 683565275, %v120
    %v124 = vshrl.u32 2475754826, %v121
    %v125 = vor.u32 %v123, %v124
    %v126 = vshll.u32 2475754826, %v120
    %v127 = vshrl.u32 2131351028, %v121
    %v128 = vor.u32 %v126, %v127
    %v129 = vshll.u32 2131351028, %v120
    %v130 = vshrl.u32 2102212464, %v121
    %v131 = vor.u32 %v129, %v130
    %v132 = vshll.u32 2102212464, %v120
    %v133 = vshrl.u32 920167782, %v121
    %v134 = vor.u32 %v132, %v133
    %v135 = vshll.u32 920167782, %v120
    %v136 = vshrl.u32 1326507024, %v121
    %v137 = vor.u32 %v135, %v136
    %vm138 = vcmp.lt.s32.totalorder %v119, 1
    %vm139 = vcmp.lt.s32.totalorder %v119, 2
    %vm140 = vcmp.lt.s32.totalorder %v119, 3
    %vm141 = vcmp.lt.s32.totalorder %v119, 4
    %v142 = vsel %vm138, %v122, %v125
    %v143 = vsel %vm141, %v131, 2102212464
    %v144 = vsel %vm140, %v128, %v143
    %v145 = vsel %vm139, %v142, %v144
    %v146 = vsel %vm138, %v125, %v128
    %v147 = vsel %vm141, %v134, 920167782
    %v148 = vsel %vm140, %v131, %v147
    %v149 = vsel %vm139, %v146, %v148
    %v150 = vsel %vm138, %v128, %v131
    %v151 = vsel %vm141, %v137, 1326507024
    %v152 = vsel %vm140, %v134, %v151
    %v153 = vsel %vm139, %v150, %v152
    %v154 = vshll.u32 %v114, 8
    %v155 = vand.u32 %v154, 65535
    %v156 = vshrl.u32 %v154, 16
    %v157 = vand.u32 %v153, 65535
    %v158 = vshrl.u32 %v153, 16
    %v159 = vmul.u32 %v155, %v157
    %v160 = vmul.u32 %v155, %v158
    %v161 = vmul.u32 %v156, %v157
    %v162 = vmul.u32 %v156, %v158
    %v163 = vshll.u32 %v160, 16
    %v164 = vshrl.u32 %v160, 16
    %v165 = vshll.u32 %v161, 16
    %v166 = vshrl.u32 %v161, 16
    %vm167 = vc.u32 %v159, %v163
    %v168 = vsel %vm167, 1, 0
    %v169 = vadd.s32 %v159, %v163
    %v170 = vadd.s32 %v162, %v168
    %vm171 = vc.u32 %v169, %v165
    %v172 = vsel %vm171, 1, 0
    %v173 = vadd.s32 %v169, %v165
    %v174 = vadd.s32 %v170, %v172
    %v175 = vadd.s32 %v174, %v164
    %v176 = vadd.s32 %v175, %v166
    %v177 = vand.u32 %v154, 65535
    %v178 = vshrl.u32 %v154, 16
    %v179 = vand.u32 %v149, 65535
    %v180 = vshrl.u32 %v149, 16
    %v181 = vmul.u32 %v177, %v179
    %v182 = vmul.u32 %v177, %v180
    %v183 = vmul.u32 %v178, %v179
    %v184 = vmul.u32 %v178, %v180
    %v185 = vshll.u32 %v182, 16
    %v186 = vshrl.u32 %v182, 16
    %v187 = vshll.u32 %v183, 16
    %v188 = vshrl.u32 %v183, 16
    %vm189 = vc.u32 %v181, %v185
    %v190 = vsel %vm189, 1, 0
    %v191 = vadd.s32 %v181, %v185
    %v192 = vadd.s32 %v184, %v190
    %vm193 = vc.u32 %v191, %v187
    %v194 = vsel %vm193, 1, 0
    %v195 = vadd.s32 %v191, %v187
    %v196 = vadd.s32 %v192, %v194
    %v197 = vadd.s32 %v196, %v186
    %v198 = vadd.s32 %v197, %v188
    %v199 = vmul.u32 %v154, %v145
    %v200 = vadd.s32 %v176, %v195
    %vm201 = vc.u32 %v176, %v195
    %v202 = vadd.s32 %v198, 1
    %v203 = vsel %vm201, %v202, %v198
    %v204 = vadd.s32 %v199, %v203
    %v205 = vadd.s32 %v204, 536870912
    %v206 = vshrl.u32 %v205, 30
    %v207 = vshll.u32 %v206, 30
    %v208 = vsub.s32 %v204, %v207
    %vm209 = vcmp.lt.s32.totalorder %v208, 0
    %v210 = vsub.s32 0, %v208
    %v211 = vsel %vm209, %v210, %v208
    %v212 = vclz %v211
    %v213 = vsub.s32 %v212, 2
    %vm214 = vcmp.gt.s32.totalorder 0, %v213
    %v215 = vsel %vm214, 0, %v213
    %v216 = vsub.s32 32, %v215
    %v217 = vshll.u32 %v208, %v215
    %v218 = vshrl.u32 %v200, %v216
    %v219 = vor.u32 %v217, %v218
    %v220 = vsub.s32 4294967266, %v215
    %v221 = vadd.s32 %v220, 127
    %v222 = vshll.u32 %v221, 23
    %v223 = vor.u32 4788187, %v222
    %v224 = vand.u32 2147483647, %v223
    %v226 = vcvt.s32.f32 %v219
    %v227 = vmul.f32 %v226, %v224
    %v228 = vxor.u32 %v227, 2147483648
    %v229 = vsel %vm108, %v228, %v227
    %v230 = vsub.s32 4, %v206
    %v231 = vsel %vm108, %v230, %v206
    %v232 = vsel %vm107, %v87, %v229
    %v233 = vsel %vm107, 0, %v231
    %v234 = vmul.f32 %v232, %v232
    %v235 = vmul.f32 %v234, -0.001358992
    %v236 = vadd.f32 %v235, 0.041655596
    %v237 = vmul.f32 %v234, %v236
    %v238 = vadd.f32 %v237, -0.4999988
    %v239 = vmul.f32 %v234, %v238
    %v240 = vadd.f32 1.0, %v239
    %v241 = vmul.f32 %v232, %v232
    %v242 = vmul.f32 %v241, -0.00019511016
    %v243 = vadd.f32 %v242, 0.008332121
    %v244 = vmul.f32 %v241, %v243
    %v245 = vadd.f32 %v244, -0.16666654
    %v246 = vmul.f32 %v241, %v245
    %v247 = vadd.f32 %v246, 1.0
    %v248 = vmul.f32 %v247, %v232
    %vm249 = vweird.f32 %v87
    %v250 = vadd.s32 %v233, 3
    %v251 = vand.u32 %v250, 3
    %vm252 = vcmp.lt.s32.totalorder %v251, 2
    %vm253 = vcmp.eq.s32.totalorder %v251, 0
    %v254 = vxor.u32 %v248, 2147483648
    %v255 = vsel %vm253, %v240, %v254
    %vm256 = vcmp.eq.s32.totalorder %v251, 2
    %v257 = vxor.u32 %v240, 2147483648
    %v258 = vsel %vm256, %v257, %v248
    %v259 = vsel %vm252, %v255, %v258
    %v260 = vsel %vm249, nan, %v259
    %v261 = vand.u32 2147483647, %v89
    %vm262 = vcmp.le.f32.partialorder %v261, 0.7853982
    %vm263 = vcmp.lt.s32.totalorder %v89, 0
    %v264 = vand.u32 %v89, 2139095040
    %v265 = vshrl.u32 %v264, 23
    %v266 = vsub.s32 %v265, 127
    %v267 = vand.u32 2147483647, %v89
    %v268 = vand.u32 %v267, 8388607
    %v269 = vor.u32 %v268, 8388608
    %v270 = vsub.s32 0, %v269
    %v271 = vadd.s32 %v266, 1
    %vm272 = vcmp.gt.s32.totalorder %v271, 0
    %v273 = vsel %vm272, %v271, 0
    %v274 = vshrl.u32 %v273, 5
    %v275 = vand.u32 %v273, 31
    %v276 = vsub.s32 32, %v275
    %v277 = vshrl.u32 683565275, %v276
    %v278 = vshll.u32 683565275, %v275
    %v279 = vshrl.u32 2475754826, %v276
    %v280 = vor.u32 %v278, %v279
    %v281 = vshll.u32 2475754826, %v275
    %v282 = vshrl.u32 2131351028, %v276
    %v283 = vor.u32 %v281, %v282
    %v284 = vshll.u32 2131351028, %v275
    %v285 = vshrl.u32 2102212464, %v276
    %v286 = vor.u32 %v284, %v285
    %v287 = vshll.u32 2102212464, %v275
    %v288 = vshrl.u32 920167782, %v276
    %v289 = vor.u32 %v287, %v288
    %v290 = vshll.u32 920167782, %v275
    %v291 = vshrl.u32 1326507024, %v276
    %v292 = vor.u32 %v290, %v291
    %vm293 = vcmp.lt.s32.totalorder %v274, 1
    %vm294 = vcmp.lt.s32.totalorder %v274, 2
    %vm295 = vcmp.lt.s32.totalorder %v274, 3
    %vm296 = vcmp.lt.s32.totalorder %v274, 4
    %v297 = vsel %vm293, %v277, %v280
    %v298 = vsel %vm296, %v286, 2102212464
    %v299 = vsel %vm295, %v283, %v298
    %v300 = vsel %vm294, %v297, %v299
    %v301 = vsel %vm293, %v280, %v283
    %v302 = vsel %vm296, %v289, 920167782
    %v303 = vsel %vm295, %v286, %v302
    %v304 = vsel %vm294, %v301, %v303
    %v305 = vsel %vm293, %v283, %v286
    %v306 = vsel %vm296, %v292, 1326507024
    %v307 = vsel %vm295, %v289, %v306
    %v308 = vsel %vm294, %v305, %v307
    %v309 = vshll.u32 %v269, 8
    %v310 = vand.u32 %v309, 65535
    %v311 = vshrl.u32 %v309, 16
    %v312 = vand.u32 %v308, 65535
    %v313 = vshrl.u32 %v308, 16
    %v314 = vmul.u32 %v310, %v312
    %v315 = vmul.u32 %v310, %v313
    %v316 = vmul.u32 %v311, %v312
    %v317 = vmul.u32 %v311, %v313
    %v318 = vshll.u32 %v315, 16
    %v319 = vshrl.u32 %v315, 16
    %v320 = vshll.u32 %v316, 16
    %v321 = vshrl.u32 %v316, 16
    %vm322 = vc.u32 %v314, %v318
    %v323 = vsel %vm322, 1, 0
    %v324 = vadd.s32 %v314, %v318
    %v325 = vadd.s32 %v317, %v323
    %vm326 = vc.u32 %v324, %v320
    %v327 = vsel %vm326, 1, 0
    %v328 = vadd.s32 %v324, %v320
    %v329 = vadd.s32 %v325, %v327
    %v330 = vadd.s32 %v329, %v319
    %v331 = vadd.s32 %v330, %v321
    %v332 = vand.u32 %v309, 65535
    %v333 = vshrl.u32 %v309, 16
    %v334 = vand.u32 %v304, 65535
    %v335 = vshrl.u32 %v304, 16
    %v336 = vmul.u32 %v332, %v334
    %v337 = vmul.u32 %v332, %v335
    %v338 = vmul.u32 %v333, %v334
    %v339 = vmul.u32 %v333, %v335
    %v340 = vshll.u32 %v337, 16
    %v341 = vshrl.u32 %v337, 16
    %v342 = vshll.u32 %v338, 16
    %v343 = vshrl.u32 %v338, 16
    %vm344 = vc.u32 %v336, %v340
    %v345 = vsel %vm344, 1, 0
    %v346 = vadd.s32 %v336, %v340
    %v347 = vadd.s32 %v339, %v345
    %vm348 = vc.u32 %v346, %v342
    %v349 = vsel %vm348, 1, 0
    %v350 = vadd.s32 %v346, %v342
    %v351 = vadd.s32 %v347, %v349
    %v352 = vadd.s32 %v351, %v341
    %v353 = vadd.s32 %v352, %v343
    %v354 = vmul.u32 %v309, %v300
    %v355 = vadd.s32 %v331, %v350
    %vm356 = vc.u32 %v331, %v350
    %v357 = vadd.s32 %v353, 1
    %v358 = vsel %vm356, %v357, %v353
    %v359 = vadd.s32 %v354, %v358
    %v360 = vadd.s32 %v359, 536870912
    %v361 = vshrl.u32 %v360, 30
    %v362 = vshll.u32 %v361, 30
    %v363 = vsub.s32 %v359, %v362
    %vm364 = vcmp.lt.s32.totalorder %v363, 0
    %v365 = vsub.s32 0, %v363
    %v366 = vsel %vm364, %v365, %v363
    %v367 = vclz %v366
    %v368 = vsub.s32 %v367, 2
    %vm369 = vcmp.gt.s32.totalorder 0, %v368
    %v370 = vsel %vm369, 0, %v368
    %v371 = vsub.s32 32, %v370
    %v372 = vshll.u32 %v363, %v370
    %v373 = vshrl.u32 %v355, %v371
    %v374 = vor.u32 %v372, %v373
    %v375 = vsub.s32 4294967266, %v370
    %v376 = vadd.s32 %v375, 127
    %v377 = vshll.u32 %v376, 23
    %v378 = vor.u32 4788187, %v377
    %v379 = vand.u32 2147483647, %v378
    %v381 = vcvt.s32.f32 %v374
    %v382 = vmul.f32 %v381, %v379
    %v383 = vxor.u32 %v382, 2147483648
    %v384 = vsel %vm263, %v383, %v382
    %v385 = vsub.s32 4, %v361
    %v386 = vsel %vm263, %v385, %v361
    %v387 = vsel %vm262, %v89, %v384
    %v388 = vsel %vm262, 0, %v386
    %v389 = vmul.f32 %v387, %v387
    %v390 = vmul.f32 %v389, -0.001358992
    %v391 = vadd.f32 %v390, 0.041655596
    %v392 = vmul.f32 %v389, %v391
    %v393 = vadd.f32 %v392, -0.4999988
    %v394 = vmul.f32 %v389, %v393
    %v395 = vadd.f32 1.0, %v394
    %v396 = vmul.f32 %v387, %v387
    %v397 = vmul.f32 %v396, -0.00019511016
    %v398 = vadd.f32 %v397, 0.008332121
    %v399 = vmul.f32 %v396, %v398
    %v400 = vadd.f32 %v399, -0.16666654
    %v401 = vmul.f32 %v396, %v400
    %v402 = vadd.f32 %v401, 1.0
    %v403 = vmul.f32 %v402, %v387
    %vm404 = vweird.f32 %v89
    %v405 = vadd.s32 %v388, 3
    %v406 = vand.u32 %v405, 3
    %vm407 = vcmp.lt.s32.totalorder %v406, 2
    %vm408 = vcmp.eq.s32.totalorder %v406, 0
    %v409 = vxor.u32 %v403, 2147483648
    %v410 = vsel %vm408, %v395, %v409
    %vm411 = vcmp.eq.s32.totalorder %v406, 2
    %v412 = vxor.u32 %v395, 2147483648
    %v413 = vsel %vm411, %v412, %v403
    %v414 = vsel %vm407, %v410, %v413
    %v415 = vsel %vm404, nan, %v414
    %v416 = vand.u32 2147483647, %v92
    %vm417 = vcmp.le.f32.partialorder %v416, 0.7853982
    %vm418 = vcmp.lt.s32.totalorder %v92, 0
    %v419 = vand.u32 %v92, 2139095040
    %v420 = vshrl.u32 %v419, 23
    %v421 = vsub.s32 %v420, 127
    %v422 = vand.u32 2147483647, %v92
    %v423 = vand.u32 %v422, 8388607
    %v424 = vor.u32 %v423, 8388608
    %v425 = vsub.s32 0, %v424
    %v426 = vadd.s32 %v421, 1
    %vm427 = vcmp.gt.s32.totalorder %v426, 0
    %v428 = vsel %vm427, %v426, 0
    %v429 = vshrl.u32 %v428, 5
    %v430 = vand.u32 %v428, 31
    %v431 = vsub.s32 32, %v430
    %v432 = vshrl.u32 683565275, %v431
    %v433 = vshll.u32 683565275, %v430
    %v434 = vshrl.u32 2475754826, %v431
    %v435 = vor.u32 %v433, %v434
    %v436 = vshll.u32 2475754826, %v430
    %v437 = vshrl.u32 2131351028, %v431
    %v438 = vor.u32 %v436, %v437
    %v439 = vshll.u32 2131351028, %v430
    %v440 = vshrl.u32 2102212464, %v431
    %v441 = vor.u32 %v439, %v440
    %v442 = vshll.u32 2102212464, %v430
    %v443 = vshrl.u32 920167782, %v431
    %v444 = vor.u32 %v442, %v443
    %v445 = vshll.u32 920167782, %v430
    %v446 = vshrl.u32 1326507024, %v431
    %v447 = vor.u32 %v445, %v446
    %vm448 = vcmp.lt.s32.totalorder %v429, 1
    %vm449 = vcmp.lt.s32.totalorder %v429, 2
    %vm450 = vcmp.lt.s32.totalorder %v429, 3
    %vm451 = vcmp.lt.s32.totalorder %v429, 4
    %v452 = vsel %vm448, %v432, %v435
    %v453 = vsel %vm451, %v441, 2102212464
    %v454 = vsel %vm450, %v438, %v453
    %v455 = vsel %vm449, %v452, %v454
    %v456 = vsel %vm448, %v435, %v438
    %v457 = vsel %vm451, %v444, 920167782
    %v458 = vsel %vm450, %v441, %v457
    %v459 = vsel %vm449, %v456, %v458
    %v460 = vsel %vm448, %v438, %v441
    %v461 = vsel %vm451, %v447, 1326507024
    %v462 = vsel %vm450, %v444, %v461
    %v463 = vsel %vm449, %v460, %v462
    %v464 = vshll.u32 %v424, 8
    %v465 = vand.u32 %v464, 65535
    %v466 = vshrl.u32 %v464, 16
    %v467 = vand.u32 %v463, 65535
    %v468 = vshrl.u32 %v463, 16
    %v469 = vmul.u32 %v465, %v467
    %v470 = vmul.u32 %v465, %v468
    %v471 = vmul.u32 %v466, %v467
    %v472 = vmul.u32 %v466, %v468
    %v473 = vshll.u32 %v470, 16
    %v474 = vshrl.u32 %v470, 16
    %v475 = vshll.u32 %v471, 16
    %v476 = vshrl.u32 %v471, 16
    %vm477 = vc.u32 %v469, %v473
    %v478 = vsel %vm477, 1, 0
    %v479 = vadd.s32 %v469, %v473
    %v480 = vadd.s32 %v472, %v478
    %vm481 = vc.u32 %v479, %v475
    %v482 = vsel %vm481, 1, 0
    %v483 = vadd.s32 %v479, %v475
    %v484 = vadd.s32 %v480, %v482
    %v485 = vadd.s32 %v484, %v474
    %v486 = vadd.s32 %v485, %v476
    %v487 = vand.u32 %v464, 65535
    %v488 = vshrl.u32 %v464, 16
    %v489 = vand.u32 %v459, 65535
    %v490 = vshrl.u32 %v459, 16
    %v491 = vmul.u32 %v487, %v489
    %v492 = vmul.u32 %v487, %v490
    %v493 = vmul.u32 %v488, %v489
    %v494 = vmul.u32 %v488, %v490
    %v495 = vshll.u32 %v492, 16
    %v496 = vshrl.u32 %v492, 16
    %v497 = vshll.u32 %v493, 16
    %v498 = vshrl.u32 %v493, 16
    %vm499 = vc.u32 %v491, %v495
    %v500 = vsel %vm499, 1, 0
    %v501 = vadd.s32 %v491, %v495
    %v502 = vadd.s32 %v494, %v500
    %vm503 = vc.u32 %v501, %v497
    %v504 = vsel %vm503, 1, 0
    %v505 = vadd.s32 %v501, %v497
    %v506 = vadd.s32 %v502, %v504
    %v507 = vadd.s32 %v506, %v496
    %v508 = vadd.s32 %v507, %v498
    %v509 = vmul.u32 %v464, %v455
    %v510 = vadd.s32 %v486, %v505
    %vm511 = vc.u32 %v486, %v505
    %v512 = vadd.s32 %v508, 1
    %v513 = vsel %vm511, %v512, %v508
    %v514 = vadd.s32 %v509, %v513
    %v515 = vadd.s32 %v514, 536870912
    %v516 = vshrl.u32 %v515, 30
    %v517 = vshll.u32 %v516, 30
    %v518 = vsub.s32 %v514, %v517
    %vm519 = vcmp.lt.s32.totalorder %v518, 0
    %v520 = vsub.s32 0, %v518
    %v521 = vsel %vm519, %v520, %v518
    %v522 = vclz %v521
    %v523 = vsub.s32 %v522, 2
    %vm524 = vcmp.gt.s32.totalorder 0, %v523
    %v525 = vsel %vm524, 0, %v523
    %v526 = vsub.s32 32, %v525
    %v527 = vshll.u32 %v518, %v525
    %v528 = vshrl.u32 %v510, %v526
    %v529 = vor.u32 %v527, %v528
    %v530 = vsub.s32 4294967266, %v525
    %v531 = vadd.s32 %v530, 127
    %v532 = vshll.u32 %v531, 23
    %v533 = vor.u32 4788187, %v532
    %v534 = vand.u32 2147483647, %v533
    %v536 = vcvt.s32.f32 %v529
    %v537 = vmul.f32 %v536, %v534
    %v538 = vxor.u32 %v537, 2147483648
    %v539 = vsel %vm418, %v538, %v537
    %v540 = vsub.s32 4, %v516
    %v541 = vsel %vm418, %v540, %v516
    %v542 = vsel %vm417, %v92, %v539
    %v543 = vsel %vm417, 0, %v541
    %v544 = vmul.f32 %v542, %v542
    %v545 = vmul.f32 %v544, -0.001358992
    %v546 = vadd.f32 %v545, 0.041655596
    %v547 = vmul.f32 %v544, %v546
    %v548 = vadd.f32 %v547, -0.4999988
    %v549 = vmul.f32 %v544, %v548
    %v550 = vadd.f32 1.0, %v549
    %v551 = vmul.f32 %v542, %v542
    %v552 = vmul.f32 %v551, -0.00019511016
    %v553 = vadd.f32 %v552, 0.008332121
    %v554 = vmul.f32 %v551, %v553
    %v555 = vadd.f32 %v554, -0.16666654
    %v556 = vmul.f32 %v551, %v555
    %v557 = vadd.f32 %v556, 1.0
    %v558 = vmul.f32 %v557, %v542
    %vm559 = vweird.f32 %v92
    %v560 = vadd.s32 %v543, 3
    %v561 = vand.u32 %v560, 3
    %vm562 = vcmp.lt.s32.totalorder %v561, 2
    %vm563 = vcmp.eq.s32.totalorder %v561, 0
    %v564 = vxor.u32 %v558, 2147483648
    %v565 = vsel %vm563, %v550, %v564
    %vm566 = vcmp.eq.s32.totalorder %v561, 2
    %v567 = vxor.u32 %v550, 2147483648
    %v568 = vsel %vm566, %v567, %v558
    %v569 = vsel %vm562, %v565, %v568
    %v570 = vsel %vm559, nan, %v569
    %v571 = vand.u32 2147483647, %v94
    %vm572 = vcmp.le.f32.partialorder %v571, 0.7853982
    %vm573 = vcmp.lt.s32.totalorder %v94, 0
    %v574 = vand.u32 %v94, 2139095040
    %v575 = vshrl.u32 %v574, 23
    %v576 = vsub.s32 %v575, 127
    %v577 = vand.u32 2147483647, %v94
    %v578 = vand.u32 %v577, 8388607
    %v579 = vor.u32 %v578, 8388608
    %v580 = vsub.s32 0, %v579
    %v581 = vadd.s32 %v576, 1
    %vm582 = vcmp.gt.s32.totalorder %v581, 0
    %v583 = vsel %vm582, %v581, 0
    %v584 = vshrl.u32 %v583, 5
    %v585 = vand.u32 %v583, 31
    %v586 = vsub.s32 32, %v585
    %v587 = vshrl.u32 683565275, %v586
    %v588 = vshll.u32 683565275, %v585
    %v589 = vshrl.u32 2475754826, %v586
    %v590 = vor.u32 %v588, %v589
    %v591 = vshll.u32 2475754826, %v585
    %v592 = vshrl.u32 2131351028, %v586
    %v593 = vor.u32 %v591, %v592
    %v594 = vshll.u32 2131351028, %v585
    %v595 = vshrl.u32 2102212464, %v586
    %v596 = vor.u32 %v594, %v595
    %v597 = vshll.u32 2102212464, %v585
    %v598 = vshrl.u32 920167782, %v586
    %v599 = vor.u32 %v597, %v598
    %v600 = vshll.u32 920167782, %v585
    %v601 = vshrl.u32 1326507024, %v586
    %v602 = vor.u32 %v600, %v601
    %vm603 = vcmp.lt.s32.totalorder %v584, 1
    %vm604 = vcmp.lt.s32.totalorder %v584, 2
    %vm605 = vcmp.lt.s32.totalorder %v584, 3
    %vm606 = vcmp.lt.s32.totalorder %v584, 4
    %v607 = vsel %vm603, %v587, %v590
    %v608 = vsel %vm606, %v596, 2102212464
    %v609 = vsel %vm605, %v593, %v608
    %v610 = vsel %vm604, %v607, %v609
    %v611 = vsel %vm603, %v590, %v593
    %v612 = vsel %vm606, %v599, 920167782
    %v613 = vsel %vm605, %v596, %v612
    %v614 = vsel %vm604, %v611, %v613
    %v615 = vsel %vm603, %v593, %v596
    %v616 = vsel %vm606, %v602, 1326507024
    %v617 = vsel %vm605, %v599, %v616
    %v618 = vsel %vm604, %v615, %v617
    %v619 = vshll.u32 %v579, 8
    %v620 = vand.u32 %v619, 65535
    %v621 = vshrl.u32 %v619, 16
    %v622 = vand.u32 %v618, 65535
    %v623 = vshrl.u32 %v618, 16
    %v624 = vmul.u32 %v620, %v622
    %v625 = vmul.u32 %v620, %v623
    %v626 = vmul.u32 %v621, %v622
    %v627 = vmul.u32 %v621, %v623
    %v628 = vshll.u32 %v625, 16
    %v629 = vshrl.u32 %v625, 16
    %v630 = vshll.u32 %v626, 16
    %v631 = vshrl.u32 %v626, 16
    %vm632 = vc.u32 %v624, %v628
    %v633 = vsel %vm632, 1, 0
    %v634 = vadd.s32 %v624, %v628
    %v635 = vadd.s32 %v627, %v633
    %vm636 = vc.u32 %v634, %v630
    %v637 = vsel %vm636, 1, 0
    %v638 = vadd.s32 %v634, %v630
    %v639 = vadd.s32 %v635, %v637
    %v640 = vadd.s32 %v639, %v629
    %v641 = vadd.s32 %v640, %v631
    %v642 = vand.u32 %v619, 65535
    %v643 = vshrl.u32 %v619, 16
    %v644 = vand.u32 %v614, 65535
    %v645 = vshrl.u32 %v614, 16
    %v646 = vmul.u32 %v642, %v644
    %v647 = vmul.u32 %v642, %v645
    %v648 = vmul.u32 %v643, %v644
    %v649 = vmul.u32 %v643, %v645
    %v650 = vshll.u32 %v647, 16
    %v651 = vshrl.u32 %v647, 16
    %v652 = vshll.u32 %v648, 16
    %v653 = vshrl.u32 %v648, 16
    %vm654 = vc.u32 %v646, %v650
    %v655 = vsel %vm654, 1, 0
    %v656 = vadd.s32 %v646, %v650
    %v657 = vadd.s32 %v649, %v655
    %vm658 = vc.u32 %v656, %v652
    %v659 = vsel %vm658, 1, 0
    %v660 = vadd.s32 %v656, %v652
    %v661 = vadd.s32 %v657, %v659
    %v662 = vadd.s32 %v661, %v651
    %v663 = vadd.s32 %v662, %v653
    %v664 = vmul.u32 %v619, %v610
    %v665 = vadd.s32 %v641, %v660
    %vm666 = vc.u32 %v641, %v660
    %v667 = vadd.s32 %v663, 1
    %v668 = vsel %vm666, %v667, %v663
    %v669 = vadd.s32 %v664, %v668
    %v670 = vadd.s32 %v669, 536870912
    %v671 = vshrl.u32 %v670, 30
    %v672 = vshll.u32 %v671, 30
    %v673 = vsub.s32 %v669, %v672
    %vm674 = vcmp.lt.s32.totalorder %v673, 0
    %v675 = vsub.s32 0, %v673
    %v676 = vsel %vm674, %v675, %v673
    %v677 = vclz %v676
    %v678 = vsub.s32 %v677, 2
    %vm679 = vcmp.gt.s32.totalorder 0, %v678
    %v680 = vsel %vm679, 0, %v678
    %v681 = vsub.s32 32, %v680
    %v682 = vshll.u32 %v673, %v680
    %v683 = vshrl.u32 %v665, %v681
    %v684 = vor.u32 %v682, %v683
    %v685 = vsub.s32 4294967266, %v680
    %v686 = vadd.s32 %v685, 127
    %v687 = vshll.u32 %v686, 23
    %v688 = vor.u32 4788187, %v687
    %v689 = vand.u32 2147483647, %v688
    %v691 = vcvt.s32.f32 %v684
    %v692 = vmul.f32 %v691, %v689
    %v693 = vxor.u32 %v692, 2147483648
    %v694 = vsel %vm573, %v693, %v692
    %v695 = vsub.s32 4, %v671
    %v696 = vsel %vm573, %v695, %v671
    %v697 = vsel %vm572, %v94, %v694
    %v698 = vsel %vm572, 0, %v696
    %v699 = vmul.f32 %v697, %v697
    %v700 = vmul.f32 %v699, -0.001358992
    %v701 = vadd.f32 %v700, 0.041655596
    %v702 = vmul.f32 %v699, %v701
    %v703 = vadd.f32 %v702, -0.4999988
    %v704 = vmul.f32 %v699, %v703
    %v705 = vadd.f32 1.0, %v704
    %v706 = vmul.f32 %v697, %v697
    %v707 = vmul.f32 %v706, -0.00019511016
    %v708 = vadd.f32 %v707, 0.008332121
    %v709 = vmul.f32 %v706, %v708
    %v710 = vadd.f32 %v709, -0.16666654
    %v711 = vmul.f32 %v706, %v710
    %v712 = vadd.f32 %v711, 1.0
    %v713 = vmul.f32 %v712, %v697
    %vm714 = vweird.f32 %v94
    %v715 = vadd.s32 %v698, 3
    %v716 = vand.u32 %v715, 3
    %vm717 = vcmp.lt.s32.totalorder %v716, 2
    %vm718 = vcmp.eq.s32.totalorder %v716, 0
    %v719 = vxor.u32 %v713, 2147483648
    %v720 = vsel %vm718, %v705, %v719
    %vm721 = vcmp.eq.s32.totalorder %v716, 2
    %v722 = vxor.u32 %v705, 2147483648
    %v723 = vsel %vm721, %v722, %v713
    %v724 = vsel %vm717, %v720, %v723
    %v725 = vsel %vm714, nan, %v724
    %v726 = vand.u32 2147483647, %v97
    %vm727 = vcmp.le.f32.partialorder %v726, 0.7853982
    %vm728 = vcmp.lt.s32.totalorder %v97, 0
    %v729 = vand.u32 %v97, 2139095040
    %v730 = vshrl.u32 %v729, 23
    %v731 = vsub.s32 %v730, 127
    %v732 = vand.u32 2147483647, %v97
    %v733 = vand.u32 %v732, 8388607
    %v734 = vor.u32 %v733, 8388608
    %v735 = vsub.s32 0, %v734
    %v736 = vadd.s32 %v731, 1
    %vm737 = vcmp.gt.s32.totalorder %v736, 0
    %v738 = vsel %vm737, %v736, 0
    %v739 = vshrl.u32 %v738, 5
    %v740 = vand.u32 %v738, 31
    %v741 = vsub.s32 32, %v740
    %v742 = vshrl.u32 683565275, %v741
    %v743 = vshll.u32 683565275, %v740
    %v744 = vshrl.u32 2475754826, %v741
    %v745 = vor.u32 %v743, %v744
    %v746 = vshll.u32 2475754826, %v740
    %v747 = vshrl.u32 2131351028, %v741
    %v748 = vor.u32 %v746, %v747
    %v749 = vshll.u32 2131351028, %v740
    %v750 = vshrl.u32 2102212464, %v741
    %v751 = vor.u32 %v749, %v750
    %v752 = vshll.u32 2102212464, %v740
    %v753 = vshrl.u32 920167782, %v741
    %v754 = vor.u32 %v752, %v753
    %v755 = vshll.u32 920167782, %v740
    %v756 = vshrl.u32 1326507024, %v741
    %v757 = vor.u32 %v755, %v756
    %vm758 = vcmp.lt.s32.totalorder %v739, 1
    %vm759 = vcmp.lt.s32.totalorder %v739, 2
    %vm760 = vcmp.lt.s32.totalorder %v739, 3
    %vm761 = vcmp.lt.s32.totalorder %v739, 4
    %v762 = vsel %vm758, %v742, %v745
    %v763 = vsel %vm761, %v751, 2102212464
    %v764 = vsel %vm760, %v748, %v763
    %v765 = vsel %vm759, %v762, %v764
    %v766 = vsel %vm758, %v745, %v748
    %v767 = vsel %vm761, %v754, 920167782
    %v768 = vsel %vm760, %v751, %v767
    %v769 = vsel %vm759, %v766, %v768
    %v770 = vsel %vm758, %v748, %v751
    %v771 = vsel %vm761, %v757, 1326507024
    %v772 = vsel %vm760, %v754, %v771
    %v773 = vsel %vm759, %v770, %v772
    %v774 = vshll.u32 %v734, 8
    %v775 = vand.u32 %v774, 65535
    %v776 = vshrl.u32 %v774, 16
    %v777 = vand.u32 %v773, 65535
    %v778 = vshrl.u32 %v773, 16
    %v779 = vmul.u32 %v775, %v777
    %v780 = vmul.u32 %v775, %v778
    %v781 = vmul.u32 %v776, %v777
    %v782 = vmul.u32 %v776, %v778
    %v783 = vshll.u32 %v780, 16
    %v784 = vshrl.u32 %v780, 16
    %v785 = vshll.u32 %v781, 16
    %v786 = vshrl.u32 %v781, 16
    %vm787 = vc.u32 %v779, %v783
    %v788 = vsel %vm787, 1, 0
    %v789 = vadd.s32 %v779, %v783
    %v790 = vadd.s32 %v782, %v788
    %vm791 = vc.u32 %v789, %v785
    %v792 = vsel %vm791, 1, 0
    %v793 = vadd.s32 %v789, %v785
    %v794 = vadd.s32 %v790, %v792
    %v795 = vadd.s32 %v794, %v784
    %v796 = vadd.s32 %v795, %v786
    %v797 = vand.u32 %v774, 65535
    %v798 = vshrl.u32 %v774, 16
    %v799 = vand.u32 %v769, 65535
    %v800 = vshrl.u32 %v769, 16
    %v801 = vmul.u32 %v797, %v799
    %v802 = vmul.u32 %v797, %v800
    %v803 = vmul.u32 %v798, %v799
    %v804 = vmul.u32 %v798, %v800
    %v805 = vshll.u32 %v802, 16
    %v806 = vshrl.u32 %v802, 16
    %v807 = vshll.u32 %v803, 16
    %v808 = vshrl.u32 %v803, 16
    %vm809 = vc.u32 %v801, %v805
    %v810 = vsel %vm809, 1, 0
    %v811 = vadd.s32 %v801, %v805
    %v812 = vadd.s32 %v804, %v810
    %vm813 = vc.u32 %v811, %v807
    %v814 = vsel %vm813, 1, 0
    %v815 = vadd.s32 %v811, %v807
    %v816 = vadd.s32 %v812, %v814
    %v817 = vadd.s32 %v816, %v806
    %v818 = vadd.s32 %v817, %v808
    %v819 = vmul.u32 %v774, %v765
    %v820 = vadd.s32 %v796, %v815
    %vm821 = vc.u32 %v796, %v815
    %v822 = vadd.s32 %v818, 1
    %v823 = vsel %vm821, %v822, %v818
    %v824 = vadd.s32 %v819, %v823
    %v825 = vadd.s32 %v824, 536870912
    %v826 = vshrl.u32 %v825, 30
    %v827 = vshll.u32 %v826, 30
    %v828 = vsub.s32 %v824, %v827
    %vm829 = vcmp.lt.s32.totalorder %v828, 0
    %v830 = vsub.s32 0, %v828
    %v831 = vsel %vm829, %v830, %v828
    %v832 = vclz %v831
    %v833 = vsub.s32 %v832, 2
    %vm834 = vcmp.gt.s32.totalorder 0, %v833
    %v835 = vsel %vm834, 0, %v833
    %v836 = vsub.s32 32, %v835
    %v837 = vshll.u32 %v828, %v835
    %v838 = vshrl.u32 %v820, %v836
    %v839 = vor.u32 %v837, %v838
    %v840 = vsub.s32 4294967266, %v835
    %v841 = vadd.s32 %v840, 127
    %v842 = vshll.u32 %v841, 23
    %v843 = vor.u32 4788187, %v842
    %v844 = vand.u32 2147483647, %v843
    %v846 = vcvt.s32.f32 %v839
    %v847 = vmul.f32 %v846, %v844
    %v848 = vxor.u32 %v847, 2147483648
    %v849 = vsel %vm728, %v848, %v847
    %v850 = vsub.s32 4, %v826
    %v851 = vsel %vm728, %v850, %v826
    %v852 = vsel %vm727, %v97, %v849
    %v853 = vsel %vm727, 0, %v851
    %v854 = vmul.f32 %v852, %v852
    %v855 = vmul.f32 %v854, -0.001358992
    %v856 = vadd.f32 %v855, 0.041655596
    %v857 = vmul.f32 %v854, %v856
    %v858 = vadd.f32 %v857, -0.4999988
    %v859 = vmul.f32 %v854, %v858
    %v860 = vadd.f32 1.0, %v859
    %v861 = vmul.f32 %v852, %v852
    %v862 = vmul.f32 %v861, -0.00019511016
    %v863 = vadd.f32 %v862, 0.008332121
    %v864 = vmul.f32 %v861, %v863
    %v865 = vadd.f32 %v864, -0.16666654
    %v866 = vmul.f32 %v861, %v865
    %v867 = vadd.f32 %v866, 1.0
    %v868 = vmul.f32 %v867, %v852
    %vm869 = vweird.f32 %v97
    %v870 = vadd.s32 %v853, 3
    %v871 = vand.u32 %v870, 3
    %vm872 = vcmp.lt.s32.totalorder %v871, 2
    %vm873 = vcmp.eq.s32.totalorder %v871, 0
    %v874 = vxor.u32 %v868, 2147483648
    %v875 = vsel %vm873, %v860, %v874
    %vm876 = vcmp.eq.s32.totalorder %v871, 2
    %v877 = vxor.u32 %v860, 2147483648
    %v878 = vsel %vm876, %v877, %v868
    %v879 = vsel %vm872, %v875, %v878
    %v880 = vsel %vm869, nan, %v879
    %v881 = vand.u32 2147483647, %v99
    %vm882 = vcmp.le.f32.partialorder %v881, 0.7853982
    %vm883 = vcmp.lt.s32.totalorder %v99, 0
    %v884 = vand.u32 %v99, 2139095040
    %v885 = vshrl.u32 %v884, 23
    %v886 = vsub.s32 %v885, 127
    %v887 = vand.u32 2147483647, %v99
    %v888 = vand.u32 %v887, 8388607
    %v889 = vor.u32 %v888, 8388608
    %v890 = vsub.s32 0, %v889
    %v891 = vadd.s32 %v886, 1
    %vm892 = vcmp.gt.s32.totalorder %v891, 0
    %v893 = vsel %vm892, %v891, 0
    %v894 = vshrl.u32 %v893, 5
    %v895 = vand.u32 %v893, 31
    %v896 = vsub.s32 32, %v895
    %v897 = vshrl.u32 683565275, %v896
    %v898 = vshll.u32 683565275, %v895
    %v899 = vshrl.u32 2475754826, %v896
    %v900 = vor.u32 %v898, %v899
    %v901 = vshll.u32 2475754826, %v895
    %v902 = vshrl.u32 2131351028, %v896
    %v903 = vor.u32 %v901, %v902
    %v904 = vshll.u32 2131351028, %v895
    %v905 = vshrl.u32 2102212464, %v896
    %v906 = vor.u32 %v904, %v905
    %v907 = vshll.u32 2102212464, %v895
    %v908 = vshrl.u32 920167782, %v896
    %v909 = vor.u32 %v907, %v908
    %v910 = vshll.u32 920167782, %v895
    %v911 = vshrl.u32 1326507024, %v896
    %v912 = vor.u32 %v910, %v911
    %vm913 = vcmp.lt.s32.totalorder %v894, 1
    %vm914 = vcmp.lt.s32.totalorder %v894, 2
    %vm915 = vcmp.lt.s32.totalorder %v894, 3
    %vm916 = vcmp.lt.s32.totalorder %v894, 4
    %v917 = vsel %vm913, %v897, %v900
    %v918 = vsel %vm916, %v906, 2102212464
    %v919 = vsel %vm915, %v903, %v918
    %v920 = vsel %vm914, %v917, %v919
    %v921 = vsel %vm913, %v900, %v903
    %v922 = vsel %vm916, %v909, 920167782
    %v923 = vsel %vm915, %v906, %v922
    %v924 = vsel %vm914, %v921, %v923
    %v925 = vsel %vm913, %v903, %v906
    %v926 = vsel %vm916, %v912, 1326507024
    %v927 = vsel %vm915, %v909, %v926
    %v928 = vsel %vm914, %v925, %v927
    %v929 = vshll.u32 %v889, 8
    %v930 = vand.u32 %v929, 65535
    %v931 = vshrl.u32 %v929, 16
    %v932 = vand.u32 %v928, 65535
    %v933 = vshrl.u32 %v928, 16
    %v934 = vmul.u32 %v930, %v932
    %v935 = vmul.u32 %v930, %v933
    %v936 = vmul.u32 %v931, %v932
    %v937 = vmul.u32 %v931, %v933
    %v938 = vshll.u32 %v935, 16
    %v939 = vshrl.u32 %v935, 16
    %v940 = vshll.u32 %v936, 16
    %v941 = vshrl.u32 %v936, 16
    %vm942 = vc.u32 %v934, %v938
    %v943 = vsel %vm942, 1, 0
    %v944 = vadd.s32 %v934, %v938
    %v945 = vadd.s32 %v937, %v943
    %vm946 = vc.u32 %v944, %v940
    %v947 = vsel %vm946, 1, 0
    %v948 = vadd.s32 %v944, %v940
    %v949 = vadd.s32 %v945, %v947
    %v950 = vadd.s32 %v949, %v939
    %v951 = vadd.s32 %v950, %v941
    %v952 = vand.u32 %v929, 65535
    %v953 = vshrl.u32 %v929, 16
    %v954 = vand.u32 %v924, 65535
    %v955 = vshrl.u32 %v924, 16
    %v956 = vmul.u32 %v952, %v954
    %v957 = vmul.u32 %v952, %v955
    %v958 = vmul.u32 %v953, %v954
    %v959 = vmul.u32 %v953, %v955
    %v960 = vshll.u32 %v957, 16
    %v961 = vshrl.u32 %v957, 16
    %v962 = vshll.u32 %v958, 16
    %v963 = vshrl.u32 %v958, 16
    %vm964 = vc.u32 %v956, %v960
    %v965 = vsel %vm964, 1, 0
    %v966 = vadd.s32 %v956, %v960
    %v967 = vadd.s32 %v959, %v965
    %vm968 = vc.u32 %v966, %v962
    %v969 = vsel %vm968, 1, 0
    %v970 = vadd.s32 %v966, %v962
    %v971 = vadd.s32 %v967, %v969
    %v972 = vadd.s32 %v971, %v961
    %v973 = vadd.s32 %v972, %v963
    %v974 = vmul.u32 %v929, %v920
    %v975 = vadd.s32 %v951, %v970
    %vm976 = vc.u32 %v951, %v970
    %v977 = vadd.s32 %v973, 1
    %v978 = vsel %vm976, %v977, %v973
    %v979 = vadd.s32 %v974, %v978
    %v980 = vadd.s32 %v979, 536870912
    %v981 = vshrl.u32 %v980, 30
    %v982 = vshll.u32 %v981, 30
    %v983 = vsub.s32 %v979, %v982
    %vm984 = vcmp.lt.s32.totalorder %v983, 0
    %v985 = vsub.s32 0, %v983
    %v986 = vsel %vm984, %v985, %v983
    %v987 = vclz %v986
    %v988 = vsub.s32 %v987, 2
    %vm989 = vcmp.gt.s32.totalorder 0, %v988
    %v990 = vsel %vm989, 0, %v988
    %v991 = vsub.s32 32, %v990
    %v992 = vshll.u32 %v983, %v990
    %v993 = vshrl.u32 %v975, %v991
    %v994 = vor.u32 %v992, %v993
    %v995 = vsub.s32 4294967266, %v990
    %v996 = vadd.s32 %v995, 127
    %v997 = vshll.u32 %v996, 23
    %v998 = vor.u32 4788187, %v997
    %v999 = vand.u32 2147483647, %v998
    %v1001 = vcvt.s32.f32 %v994
    %v1002 = vmul.f32 %v1001, %v999
    %v1003 = vxor.u32 %v1002, 2147483648
    %v1004 = vsel %vm883, %v1003, %v1002
    %v1005 = vsub.s32 4, %v981
    %v1006 = vsel %vm883, %v1005, %v981
    %v1007 = vsel %vm882, %v99, %v1004
    %v1008 = vsel %vm882, 0, %v1006
    %v1009 = vmul.f32 %v1007, %v1007
    %v1010 = vmul.f32 %v1009, -0.001358992
    %v1011 = vadd.f32 %v1010, 0.041655596
    %v1012 = vmul.f32 %v1009, %v1011
    %v1013 = vadd.f32 %v1012, -0.4999988
    %v1014 = vmul.f32 %v1009, %v1013
    %v1015 = vadd.f32 1.0, %v1014
    %v1016 = vmul.f32 %v1007, %v1007
    %v1017 = vmul.f32 %v1016, -0.00019511016
    %v1018 = vadd.f32 %v1017, 0.008332121
    %v1019 = vmul.f32 %v1016, %v1018
    %v1020 = vadd.f32 %v1019, -0.16666654
    %v1021 = vmul.f32 %v1016, %v1020
    %v1022 = vadd.f32 %v1021, 1.0
    %v1023 = vmul.f32 %v1022, %v1007
    %vm1024 = vweird.f32 %v99
    %v1025 = vadd.s32 %v1008, 3
    %v1026 = vand.u32 %v1025, 3
    %vm1027 = vcmp.lt.s32.totalorder %v1026, 2
    %vm1028 = vcmp.eq.s32.totalorder %v1026, 0
    %v1029 = vxor.u32 %v1023, 2147483648
    %v1030 = vsel %vm1028, %v1015, %v1029
    %vm1031 = vcmp.eq.s32.totalorder %v1026, 2
    %v1032 = vxor.u32 %v1015, 2147483648
    %v1033 = vsel %vm1031, %v1032, %v1023
    %v1034 = vsel %vm1027, %v1030, %v1033
    %v1035 = vsel %vm1024, nan, %v1034
    %v1036 = vand.u32 2147483647, %v102
    %vm1037 = vcmp.le.f32.partialorder %v1036, 0.7853982
    %vm1038 = vcmp.lt.s32.totalorder %v102, 0
    %v1039 = vand.u32 %v102, 2139095040
    %v1040 = vshrl.u32 %v1039, 23
    %v1041 = vsub.s32 %v1040, 127
    %v1042 = vand.u32 2147483647, %v102
    %v1043 = vand.u32 %v1042, 8388607
    %v1044 = vor.u32 %v1043, 8388608
    %v1045 = vsub.s32 0, %v1044
    %v1046 = vadd.s32 %v1041, 1
    %vm1047 = vcmp.gt.s32.totalorder %v1046, 0
    %v1048 = vsel %vm1047, %v1046, 0
    %v1049 = vshrl.u32 %v1048, 5
    %v1050 = vand.u32 %v1048, 31
    %v1051 = vsub.s32 32, %v1050
    %v1052 = vshrl.u32 683565275, %v1051
    %v1053 = vshll.u32 683565275, %v1050
    %v1054 = vshrl.u32 2475754826, %v1051
    %v1055 = vor.u32 %v1053, %v1054
    %v1056 = vshll.u32 2475754826, %v1050
    %v1057 = vshrl.u32 2131351028, %v1051
    %v1058 = vor.u32 %v1056, %v1057
    %v1059 = vshll.u32 2131351028, %v1050
    %v1060 = vshrl.u32 2102212464, %v1051
    %v1061 = vor.u32 %v1059, %v1060
    %v1062 = vshll.u32 2102212464, %v1050
    %v1063 = vshrl.u32 920167782, %v1051
    %v1064 = vor.u32 %v1062, %v1063
    %v1065 = vshll.u32 920167782, %v1050
    %v1066 = vshrl.u32 1326507024, %v1051
    %v1067 = vor.u32 %v1065, %v1066
    %vm1068 = vcmp.lt.s32.totalorder %v1049, 1
    %vm1069 = vcmp.lt.s32.totalorder %v1049, 2
    %vm1070 = vcmp.lt.s32.totalorder %v1049, 3
    %vm1071 = vcmp.lt.s32.totalorder %v1049, 4
    %v1072 = vsel %vm1068, %v1052, %v1055
    %v1073 = vsel %vm1071, %v1061, 2102212464
    %v1074 = vsel %vm1070, %v1058, %v1073
    %v1075 = vsel %vm1069, %v1072, %v1074
    %v1076 = vsel %vm1068, %v1055, %v1058
    %v1077 = vsel %vm1071, %v1064, 920167782
    %v1078 = vsel %vm1070, %v1061, %v1077
    %v1079 = vsel %vm1069, %v1076, %v1078
    %v1080 = vsel %vm1068, %v1058, %v1061
    %v1081 = vsel %vm1071, %v1067, 1326507024
    %v1082 = vsel %vm1070, %v1064, %v1081
    %v1083 = vsel %vm1069, %v1080, %v1082
    %v1084 = vshll.u32 %v1044, 8
    %v1085 = vand.u32 %v1084, 65535
    %v1086 = vshrl.u32 %v1084, 16
    %v1087 = vand.u32 %v1083, 65535
    %v1088 = vshrl.u32 %v1083, 16
    %v1089 = vmul.u32 %v1085, %v1087
    %v1090 = vmul.u32 %v1085, %v1088
    %v1091 = vmul.u32 %v1086, %v1087
    %v1092 = vmul.u32 %v1086, %v1088
    %v1093 = vshll.u32 %v1090, 16
    %v1094 = vshrl.u32 %v1090, 16
    %v1095 = vshll.u32 %v1091, 16
    %v1096 = vshrl.u32 %v1091, 16
    %vm1097 = vc.u32 %v1089, %v1093
    %v1098 = vsel %vm1097, 1, 0
    %v1099 = vadd.s32 %v1089, %v1093
    %v1100 = vadd.s32 %v1092, %v1098
    %vm1101 = vc.u32 %v1099, %v1095
    %v1102 = vsel %vm1101, 1, 0
    %v1103 = vadd.s32 %v1099, %v1095
    %v1104 = vadd.s32 %v1100, %v1102
    %v1105 = vadd.s32 %v1104, %v1094
    %v1106 = vadd.s32 %v1105, %v1096
    %v1107 = vand.u32 %v1084, 65535
    %v1108 = vshrl.u32 %v1084, 16
    %v1109 = vand.u32 %v1079, 65535
    %v1110 = vshrl.u32 %v1079, 16
    %v1111 = vmul.u32 %v1107, %v1109
    %v1112 = vmul.u32 %v1107, %v1110
    %v1113 = vmul.u32 %v1108, %v1109
    %v1114 = vmul.u32 %v1108, %v1110
    %v1115 = vshll.u32 %v1112, 16
    %v1116 = vshrl.u32 %v1112, 16
    %v1117 = vshll.u32 %v1113, 16
    %v1118 = vshrl.u32 %v1113, 16
    %vm1119 = vc.u32 %v1111, %v1115
    %v1120 = vsel %vm1119, 1, 0
    %v1121 = vadd.s32 %v1111, %v1115
    %v1122 = vadd.s32 %v1114, %v1120
    %vm1123 = vc.u32 %v1121, %v1117
    %v1124 = vsel %vm1123, 1, 0
    %v1125 = vadd.s32 %v1121, %v1117
    %v1126 = vadd.s32 %v1122, %v1124
    %v1127 = vadd.s32 %v1126, %v1116
    %v1128 = vadd.s32 %v1127, %v1118
    %v1129 = vmul.u32 %v1084, %v1075
    %v1130 = vadd.s32 %v1106, %v1125
    %vm1131 = vc.u32 %v1106, %v1125
    %v1132 = vadd.s32 %v1128, 1
    %v1133 = vsel %vm1131, %v1132, %v1128
    %v1134 = vadd.s32 %v1129, %v1133
    %v1135 = vadd.s32 %v1134, 536870912
    %v1136 = vshrl.u32 %v1135, 30
    %v1137 = vshll.u32 %v1136, 30
    %v1138 = vsub.s32 %v1134, %v1137
    %vm1139 = vcmp.lt.s32.totalorder %v1138, 0
    %v1140 = vsub.s32 0, %v1138
    %v1141 = vsel %vm1139, %v1140, %v1138
    %v1142 = vclz %v1141
    %v1143 = vsub.s32 %v1142, 2
    %vm1144 = vcmp.gt.s32.totalorder 0, %v1143
    %v1145 = vsel %vm1144, 0, %v1143
    %v1146 = vsub.s32 32, %v1145
    %v1147 = vshll.u32 %v1138, %v1145
    %v1148 = vshrl.u32 %v1130, %v1146
    %v1149 = vor.u32 %v1147, %v1148
    %v1150 = vsub.s32 4294967266, %v1145
    %v1151 = vadd.s32 %v1150, 127
    %v1152 = vshll.u32 %v1151, 23
    %v1153 = vor.u32 4788187, %v1152
    %v1154 = vand.u32 2147483647, %v1153
    %v1156 = vcvt.s32.f32 %v1149
    %v1157 = vmul.f32 %v1156, %v1154
    %v1158 = vxor.u32 %v1157, 2147483648
    %v1159 = vsel %vm1038, %v1158, %v1157
    %v1160 = vsub.s32 4, %v1136
    %v1161 = vsel %vm1038, %v1160, %v1136
    %v1162 = vsel %vm1037, %v102, %v1159
    %v1163 = vsel %vm1037, 0, %v1161
    %v1164 = vmul.f32 %v1162, %v1162
    %v1165 = vmul.f32 %v1164, -0.001358992
    %v1166 = vadd.f32 %v1165, 0.041655596
    %v1167 = vmul.f32 %v1164, %v1166
    %v1168 = vadd.f32 %v1167, -0.4999988
    %v1169 = vmul.f32 %v1164, %v1168
    %v1170 = vadd.f32 1.0, %v1169
    %v1171 = vmul.f32 %v1162, %v1162
    %v1172 = vmul.f32 %v1171, -0.00019511016
    %v1173 = vadd.f32 %v1172, 0.008332121
    %v1174 = vmul.f32 %v1171, %v1173
    %v1175 = vadd.f32 %v1174, -0.16666654
    %v1176 = vmul.f32 %v1171, %v1175
    %v1177 = vadd.f32 %v1176, 1.0
    %v1178 = vmul.f32 %v1177, %v1162
    %vm1179 = vweird.f32 %v102
    %v1180 = vadd.s32 %v1163, 3
    %v1181 = vand.u32 %v1180, 3
    %vm1182 = vcmp.lt.s32.totalorder %v1181, 2
    %vm1183 = vcmp.eq.s32.totalorder %v1181, 0
    %v1184 = vxor.u32 %v1178, 2147483648
    %v1185 = vsel %vm1183, %v1170, %v1184
    %vm1186 = vcmp.eq.s32.totalorder %v1181, 2
    %v1187 = vxor.u32 %v1170, 2147483648
    %v1188 = vsel %vm1186, %v1187, %v1178
    %v1189 = vsel %vm1182, %v1185, %v1188
    %v1190 = vsel %vm1179, nan, %v1189
    %v1191 = vand.u32 2147483647, %v104
    %vm1192 = vcmp.le.f32.partialorder %v1191, 0.7853982
    %vm1193 = vcmp.lt.s32.totalorder %v104, 0
    %v1194 = vand.u32 %v104, 2139095040
    %v1195 = vshrl.u32 %v1194, 23
    %v1196 = vsub.s32 %v1195, 127
    %v1197 = vand.u32 2147483647, %v104
    %v1198 = vand.u32 %v1197, 8388607
    %v1199 = vor.u32 %v1198, 8388608
    %v1200 = vsub.s32 0, %v1199
    %v1201 = vadd.s32 %v1196, 1
    %vm1202 = vcmp.gt.s32.totalorder %v1201, 0
    %v1203 = vsel %vm1202, %v1201, 0
    %v1204 = vshrl.u32 %v1203, 5
    %v1205 = vand.u32 %v1203, 31
    %v1206 = vsub.s32 32, %v1205
    %v1207 = vshrl.u32 683565275, %v1206
    %v1208 = vshll.u32 683565275, %v1205
    %v1209 = vshrl.u32 2475754826, %v1206
    %v1210 = vor.u32 %v1208, %v1209
    %v1211 = vshll.u32 2475754826, %v1205
    %v1212 = vshrl.u32 2131351028, %v1206
    %v1213 = vor.u32 %v1211, %v1212
    %v1214 = vshll.u32 2131351028, %v1205
    %v1215 = vshrl.u32 2102212464, %v1206
    %v1216 = vor.u32 %v1214, %v1215
    %v1217 = vshll.u32 2102212464, %v1205
    %v1218 = vshrl.u32 920167782, %v1206
    %v1219 = vor.u32 %v1217, %v1218
    %v1220 = vshll.u32 920167782, %v1205
    %v1221 = vshrl.u32 1326507024, %v1206
    %v1222 = vor.u32 %v1220, %v1221
    %vm1223 = vcmp.lt.s32.totalorder %v1204, 1
    %vm1224 = vcmp.lt.s32.totalorder %v1204, 2
    %vm1225 = vcmp.lt.s32.totalorder %v1204, 3
    %vm1226 = vcmp.lt.s32.totalorder %v1204, 4
    %v1227 = vsel %vm1223, %v1207, %v1210
    %v1228 = vsel %vm1226, %v1216, 2102212464
    %v1229 = vsel %vm1225, %v1213, %v1228
    %v1230 = vsel %vm1224, %v1227, %v1229
    %v1231 = vsel %vm1223, %v1210, %v1213
    %v1232 = vsel %vm1226, %v1219, 920167782
    %v1233 = vsel %vm1225, %v1216, %v1232
    %v1234 = vsel %vm1224, %v1231, %v1233
    %v1235 = vsel %vm1223, %v1213, %v1216
    %v1236 = vsel %vm1226, %v1222, 1326507024
    %v1237 = vsel %vm1225, %v1219, %v1236
    %v1238 = vsel %vm1224, %v1235, %v1237
    %v1239 = vshll.u32 %v1199, 8
    %v1240 = vand.u32 %v1239, 65535
    %v1241 = vshrl.u32 %v1239, 16
    %v1242 = vand.u32 %v1238, 65535
    %v1243 = vshrl.u32 %v1238, 16
    %v1244 = vmul.u32 %v1240, %v1242
    %v1245 = vmul.u32 %v1240, %v1243
    %v1246 = vmul.u32 %v1241, %v1242
    %v1247 = vmul.u32 %v1241, %v1243
    %v1248 = vshll.u32 %v1245, 16
    %v1249 = vshrl.u32 %v1245, 16
    %v1250 = vshll.u32 %v1246, 16
    %v1251 = vshrl.u32 %v1246, 16
    %vm1252 = vc.u32 %v1244, %v1248
    %v1253 = vsel %vm1252, 1, 0
    %v1254 = vadd.s32 %v1244, %v1248
    %v1255 = vadd.s32 %v1247, %v1253
    %vm1256 = vc.u32 %v1254, %v1250
    %v1257 = vsel %vm1256, 1, 0
    %v1258 = vadd.s32 %v1254, %v1250
    %v1259 = vadd.s32 %v1255, %v1257
    %v1260 = vadd.s32 %v1259, %v1249
    %v1261 = vadd.s32 %v1260, %v1251
    %v1262 = vand.u32 %v1239, 65535
    %v1263 = vshrl.u32 %v1239, 16
    %v1264 = vand.u32 %v1234, 65535
    %v1265 = vshrl.u32 %v1234, 16
    %v1266 = vmul.u32 %v1262, %v1264
    %v1267 = vmul.u32 %v1262, %v1265
    %v1268 = vmul.u32 %v1263, %v1264
    %v1269 = vmul.u32 %v1263, %v1265
    %v1270 = vshll.u32 %v1267, 16
    %v1271 = vshrl.u32 %v1267, 16
    %v1272 = vshll.u32 %v1268, 16
    %v1273 = vshrl.u32 %v1268, 16
    %vm1274 = vc.u32 %v1266, %v1270
    %v1275 = vsel %vm1274, 1, 0
    %v1276 = vadd.s32 %v1266, %v1270
    %v1277 = vadd.s32 %v1269, %v1275
    %vm1278 = vc.u32 %v1276, %v1272
    %v1279 = vsel %vm1278, 1, 0
    %v1280 = vadd.s32 %v1276, %v1272
    %v1281 = vadd.s32 %v1277, %v1279
    %v1282 = vadd.s32 %v1281, %v1271
    %v1283 = vadd.s32 %v1282, %v1273
    %v1284 = vmul.u32 %v1239, %v1230
    %v1285 = vadd.s32 %v1261, %v1280
    %vm1286 = vc.u32 %v1261, %v1280
    %v1287 = vadd.s32 %v1283, 1
    %v1288 = vsel %vm1286, %v1287, %v1283
    %v1289 = vadd.s32 %v1284, %v1288
    %v1290 = vadd.s32 %v1289, 536870912
    %v1291 = vshrl.u32 %v1290, 30
    %v1292 = vshll.u32 %v1291, 30
    %v1293 = vsub.s32 %v1289, %v1292
    %vm1294 = vcmp.lt.s32.totalorder %v1293, 0
    %v1295 = vsub.s32 0, %v1293
    %v1296 = vsel %vm1294, %v1295, %v1293
    %v1297 = vclz %v1296
    %v1298 = vsub.s32 %v1297, 2
    %vm1299 = vcmp.gt.s32.totalorder 0, %v1298
    %v1300 = vsel %vm1299, 0, %v1298
    %v1301 = vsub.s32 32, %v1300
    %v1302 = vshll.u32 %v1293, %v1300
    %v1303 = vshrl.u32 %v1285, %v1301
    %v1304 = vor.u32 %v1302, %v1303
    %v1305 = vsub.s32 4294967266, %v1300
    %v1306 = vadd.s32 %v1305, 127
    %v1307 = vshll.u32 %v1306, 23
    %v1308 = vor.u32 4788187, %v1307
    %v1309 = vand.u32 2147483647, %v1308
    %v1311 = vcvt.s32.f32 %v1304
    %v1312 = vmul.f32 %v1311, %v1309
    %v1313 = vxor.u32 %v1312, 2147483648
    %v1314 = vsel %vm1193, %v1313, %v1312
    %v1315 = vsub.s32 4, %v1291
    %v1316 = vsel %vm1193, %v1315, %v1291
    %v1317 = vsel %vm1192, %v104, %v1314
    %v1318 = vsel %vm1192, 0, %v1316
    %v1319 = vmul.f32 %v1317, %v1317
    %v1320 = vmul.f32 %v1319, -0.001358992
    %v1321 = vadd.f32 %v1320, 0.041655596
    %v1322 = vmul.f32 %v1319, %v1321
    %v1323 = vadd.f32 %v1322, -0.4999988
    %v1324 = vmul.f32 %v1319, %v1323
    %v1325 = vadd.f32 1.0, %v1324
    %v1326 = vmul.f32 %v1317, %v1317
    %v1327 = vmul.f32 %v1326, -0.00019511016
    %v1328 = vadd.f32 %v1327, 0.008332121
    %v1329 = vmul.f32 %v1326, %v1328
    %v1330 = vadd.f32 %v1329, -0.16666654
    %v1331 = vmul.f32 %v1326, %v1330
    %v1332 = vadd.f32 %v1331, 1.0
    %v1333 = vmul.f32 %v1332, %v1317
    %vm1334 = vweird.f32 %v104
    %v1335 = vadd.s32 %v1318, 3
    %v1336 = vand.u32 %v1335, 3
    %vm1337 = vcmp.lt.s32.totalorder %v1336, 2
    %vm1338 = vcmp.eq.s32.totalorder %v1336, 0
    %v1339 = vxor.u32 %v1333, 2147483648
    %v1340 = vsel %vm1338, %v1325, %v1339
    %vm1341 = vcmp.eq.s32.totalorder %v1336, 2
    %v1342 = vxor.u32 %v1325, 2147483648
    %v1343 = vsel %vm1341, %v1342, %v1333
    %v1344 = vsel %vm1337, %v1340, %v1343
    %v1345 = vsel %vm1334, nan, %v1344
    %1346 = vst [vmem:[#allocation2] sm:$0xff] %v260
    %1347 = vst [vmem:[#allocation2 + $0x8] sm:$0xff] %v415
    %1348 = vst [vmem:[#allocation2 + $0x10] sm:$0xff] %v570
    %1349 = vst [vmem:[#allocation2 + $0x18] sm:$0xff] %v725
    %1350 = vst [vmem:[#allocation2 + $0x20] sm:$0xff] %v880
    %1351 = vst [vmem:[#allocation2 + $0x28] sm:$0xff] %v1035
    %1352 = vst [vmem:[#allocation2 + $0x30] sm:$0xff] %v1190
    %1353 = vst [vmem:[#allocation2 + $0x38] sm:$0xff] %v1345
    // Predicated region
    $region14: #{tpu_custom_call.1} parent=1 // pred_check
      _
    $region15: #{tpu_custom_call.1} parent=1 // pred_check_branch
      %1355 = sbr.rel (0) target = $region17
    $region16: #{tpu_custom_call.1} parent=1 // pred_region
      %1357 = vsyncadd [#allocation3], 0
      %s1358 = sshll.u32 [#allocation2], 4
      %s1359 = int_to_ptr.vmem [resolvable:$true] %s1358
      %s1360 = sshll.u32 %s3, 4
      %s1361 = int_to_ptr.hbm [resolvable:$true] %s1360
      %1366 = dma.vmem_to_hbm [thread:$0]  %s1359, 1024, %s1361, [#allocation3], 128, 128, 8
    $region17: #{tpu_custom_call.1} parent=1 // pred_fallthru
      _
    // Predicated region
    $region18: #{tpu_custom_call.1} parent=1 // pred_check
      _
    $region19: #{tpu_custom_call.1} parent=1 // pred_check_branch
      %1368 = sbr.rel (0) target = $region21
    $region20: #{tpu_custom_call.1} parent=1 // pred_region
      %1370 = dma.done [#allocation3], 1024
    $region21: #{tpu_custom_call.1} parent=1 // pred_fallthru
      _
    %1371 = vsyncpa [#allocation3], 1

</llo_original>
